<compile_context>
chip_gen: v7x
topology: tpu7x:2x2x1
jax: 0.10.0
libtpu: 0.0.40
codegen_flags: <defaults>
</compile_context>

<pallas_src>
import jax
import jax.numpy as jnp
from jax.experimental import pallas as pl
from jax.experimental.pallas import tpu as pltpu

EPS = 1e-5
LANE = 128


# ----------------------------------------------------------------------------
# Kernel: one batch tile, weights VMEM-resident. 3x (matmul + bias [+ ReLU]).
# ----------------------------------------------------------------------------
def _mlp_kernel(x_ref, w1_ref, b1_ref, w2_ref, b2_ref, w3_ref, b3_ref, o_ref):
    # Layers 1-2: bf16 MXU operands, f32 accumulation; epilogue stays f32.
    h = jnp.dot(x_ref[...].astype(jnp.bfloat16), w1_ref[...],
                preferred_element_type=jnp.float32) + b1_ref[...]
    h = jnp.maximum(h, 0.0)

    h = jnp.dot(h.astype(jnp.bfloat16), w2_ref[...],
                preferred_element_type=jnp.float32) + b2_ref[...]
    h = jnp.maximum(h, 0.0)

    # Layer 3: tiny -> keep f32 operands for accuracy.
    o_ref[...] = (jnp.dot(h, w3_ref[...], preferred_element_type=jnp.float32)
                  + b3_ref[...]).astype(o_ref.dtype)


# ----------------------------------------------------------------------------
# Host-side parameter construction / folding
# ----------------------------------------------------------------------------
def _round_up(n, m):
    return ((n + m - 1) // m) * m


def _weight_norm(v, g):
    """PyTorch nn.utils.weight_norm (dim=0): w[i,:] = g[i] * v[i,:] / ||v[i,:]||."""
    norm = jnp.sqrt(jnp.sum(v * v, axis=1, keepdims=True))
    return g[:, None] * v / norm


def make_params(key, n_features, n_targets, hidden_size):
    """Raw parameters matching the PyTorch module (weight_norm v/g, BN stats)."""
    ks = jax.random.split(key, 12)

    def linear(kw, kb, fan_in, fan_out):
        bound = 1.0 / float(fan_in) ** 0.5
        v = jax.random.uniform(kw, (fan_out, fan_in), jnp.float32, -bound, bound)
        g = jnp.sqrt(jnp.sum(v * v, axis=1))          # weight_norm init: g = ||v||
        b = jax.random.uniform(kb, (fan_out,), jnp.float32, -bound, bound)
        return v, g, b

    def bn(km, kv, n):
        gamma = jnp.ones((n,), jnp.float32)
        beta = jnp.zeros((n,), jnp.float32)
        mean = 0.1 * jax.random.normal(km, (n,), jnp.float32)
        var = 1.0 + 0.1 * jax.random.uniform(kv, (n,), jnp.float32)
        return gamma, beta, mean, var

    v1, g1, b1 = linear(ks[2], ks[3], n_features, hidden_size)
    v2, g2, b2 = linear(ks[6], ks[7], hidden_size, hidden_size)
    v3, g3, b3 = linear(ks[10], ks[11], hidden_size, n_targets)
    return dict(
        bn1=bn(ks[0], ks[1], n_features), v1=v1, g1=g1, b1=b1,
        bn2=bn(ks[4], ks[5], hidden_size), v2=v2, g2=g2, b2=b2,
        bn3=bn(ks[8], ks[9], hidden_size), v3=v3, g3=g3, b3=b3,
    )


def fold_params(raw, *, lane=LANE):
    """Fold inference BatchNorm into the following Linear; pad F and T to lane."""
    def bn_scale_shift(bn):
        gamma, beta, mean, var = bn
        s = gamma * jax.lax.rsqrt(var + EPS)
        return s, beta - mean * s

    def fold(bn, v_w, g_w, bias):
        w = _weight_norm(v_w, g_w).T            # [in, out], f32
        s, t = bn_scale_shift(bn)
        w_f = s[:, None] * w                    # BN scale folded into weights
        b_f = t @ w + bias                      # BN shift folded into bias
        return w_f, b_f

    w1, b1 = fold(raw["bn1"], raw["v1"], raw["g1"], raw["b1"])
    w2, b2 = fold(raw["bn2"], raw["v2"], raw["g2"], raw["b2"])
    w3, b3 = fold(raw["bn3"], raw["v3"], raw["g3"], raw["b3"])

    n_features, _ = w1.shape
    n_targets = w3.shape[1]

    # Pad feature dim to a lane multiple (zero rows of w1 <=> zero cols of x).
    f_pad = _round_up(n_features, lane)
    if f_pad != n_features:
        w1 = jnp.pad(w1, ((0, f_pad - n_features), (0, 0)))

    # Pad target dim to a lane multiple -> unmasked lane-dense output stores.
    t_pad = _round_up(n_targets, lane)
    if t_pad != n_targets:
        w3 = jnp.pad(w3, ((0, 0), (0, t_pad - n_targets)))
        b3 = jnp.pad(b3, ((0, t_pad - n_targets),))

    return dict(
        w1=w1.astype(jnp.bfloat16), b1=b1.reshape(1, -1),
        w2=w2.astype(jnp.bfloat16), b2=b2.reshape(1, -1),
        w3=w3.astype(jnp.float32), b3=b3.reshape(1, -1),   # last layer stays f32
        n_features=n_features, n_targets=n_targets,
    )


# ----------------------------------------------------------------------------
# Batch tiling: single step when the batch fits, else an even number of
# 8-aligned tiles (balances v7x's two TensorCores; a no-op lever on v5e/v6e).
# ----------------------------------------------------------------------------
def _choose_batch_tiling(batch, block_batch):
    if batch <= block_batch:
        tb = _round_up(batch, 8)
        return tb, 1
    steps = -(-batch // _round_up(block_batch, 8))
    if steps > 1 and steps % 2:
        steps += 1
    tb = _round_up(-(-batch // steps), 8)
    return tb, steps


# ----------------------------------------------------------------------------
# Wrapper: batch-tiled pallas_call with VMEM-resident weights
# ----------------------------------------------------------------------------
def model_forward(x, kp, *, block_batch=256, out_dtype=jnp.float32):
    B, F = x.shape
    assert F == kp["n_features"]
    Fp, H = kp["w1"].shape                      # lane-padded feature dim
    Tp = kp["w3"].shape[1]                      # lane-padded target dim

    TB, steps = _choose_batch_tiling(B, block_batch)
    Bp = TB * steps
    if (Bp, Fp) != (B, F):
        x = jnp.pad(x, ((0, Bp - B), (0, Fp - F)))

    out = pl.pallas_call(
        _mlp_kernel,
        grid=(steps,),
        in_specs=[
            pl.BlockSpec((TB, Fp), lambda i: (i, 0)),   # x streams per batch tile
            pl.BlockSpec((Fp, H), lambda i: (0, 0)),    # weights/biases stay resident
            pl.BlockSpec((1, H), lambda i: (0, 0)),
            pl.BlockSpec((H, H), lambda i: (0, 0)),
            pl.BlockSpec((1, H), lambda i: (0, 0)),
            pl.BlockSpec((H, Tp), lambda i: (0, 0)),
            pl.BlockSpec((1, Tp), lambda i: (0, 0)),
        ],
        out_specs=pl.BlockSpec((TB, Tp), lambda i: (i, 0)),
        out_shape=jax.ShapeDtypeStruct((Bp, Tp), out_dtype),
        compiler_params=pltpu.CompilerParams(
            dimension_semantics=("parallel",)),         # shards batch tiles on v7x
    )(x, kp["w1"], kp["b1"], kp["w2"], kp["b2"], kp["w3"], kp["b3"])

    return out[:B, :kp["n_targets"]]


# ----------------------------------------------------------------------------
# Pure-JAX f32 reference with the ORIGINAL (unfolded) semantics
# ----------------------------------------------------------------------------
def _reference(x, raw):
    def bn(h, p):
        gamma, beta, mean, var = p
        return (h - mean) * jax.lax.rsqrt(var + EPS) * gamma + beta

    h = bn(x, raw["bn1"])
    h = jnp.maximum(h @ _weight_norm(raw["v1"], raw["g1"]).T + raw["b1"], 0.0)
    h = bn(h, raw["bn2"])
    h = jnp.maximum(h @ _weight_norm(raw["v2"], raw["g2"]).T + raw["b2"], 0.0)
    h = bn(h, raw["bn3"])
    return h @ _weight_norm(raw["v3"], raw["g3"]).T + raw["b3"]


if __name__ == "__main__":
    key = jax.random.PRNGKey(0)
    k_x, k_p = jax.random.split(key)

    batch, n_features, hidden_size, n_targets = 256, 64, 128, 32
    x = jax.random.normal(k_x, (batch, n_features), jnp.float32)

    raw = make_params(k_p, n_features, n_targets, hidden_size)
    kp = fold_params(raw)

    out = jax.block_until_ready(model_forward(x, kp, block_batch=256))
    ref = _reference(x, raw)

    assert out.shape == (batch, n_targets)
    max_err = float(jnp.max(jnp.abs(out - ref)))
    # w1/w2 are bf16 (f32 accumulation) -> tolerance loosened accordingly.
    assert jnp.allclose(out, ref, atol=5e-2, rtol=5e-2), f"mismatch, max_err={max_err}"

    print("KERNEL_OK")
</pallas_src>

<mosaic_0001>
module attributes {stable_mosaic.version = 11 : i64} {
  func.func @_mlp_kernel(%arg0: i32, %arg1: memref<256x128xf32, #tpu.memory_space<vmem>>, %arg2: memref<128x128xbf16, #tpu.memory_space<vmem>>, %arg3: memref<1x128xf32, #tpu.memory_space<vmem>>, %arg4: memref<128x128xbf16, #tpu.memory_space<vmem>>, %arg5: memref<1x128xf32, #tpu.memory_space<vmem>>, %arg6: memref<128x128xf32, #tpu.memory_space<vmem>>, %arg7: memref<1x128xf32, #tpu.memory_space<vmem>>, %arg8: memref<256x128xf32, #tpu.memory_space<vmem>>) attributes {dimension_semantics = [#tpu.dimension_semantics<parallel>], iteration_bounds = array<i64: 1>, scalar_prefetch = 0 : i64, scratch_operands = 0 : i64, tpu.core_type = #tpu.core_type<tc>, window_params = [{transform_indices = @transform_0, window_bounds = array<i64: 256, 128>}, {pipeline_mode = #tpu.pipeline_mode<synchronous>, transform_indices = @transform_1, window_bounds = array<i64: 128, 128>}, {pipeline_mode = #tpu.pipeline_mode<synchronous>, transform_indices = @transform_2, window_bounds = array<i64: 1, 128>}, {pipeline_mode = #tpu.pipeline_mode<synchronous>, transform_indices = @transform_3, window_bounds = array<i64: 128, 128>}, {pipeline_mode = #tpu.pipeline_mode<synchronous>, transform_indices = @transform_4, window_bounds = array<i64: 1, 128>}, {pipeline_mode = #tpu.pipeline_mode<synchronous>, transform_indices = @transform_5, window_bounds = array<i64: 128, 128>}, {pipeline_mode = #tpu.pipeline_mode<synchronous>, transform_indices = @transform_6, window_bounds = array<i64: 1, 128>}, {transform_indices = @transform_7, window_bounds = array<i64: 256, 128>}]} {
    %c0 = arith.constant 0 : index
    %c0_0 = arith.constant 0 : index
    %0 = vector.load %arg1[%c0, %c0_0] : memref<256x128xf32, #tpu.memory_space<vmem>>, vector<256x128xf32>
    %1 = arith.truncf %0 : vector<256x128xf32> to vector<256x128xbf16>
    %c0_1 = arith.constant 0 : index
    %c0_2 = arith.constant 0 : index
    %2 = vector.load %arg2[%c0_1, %c0_2] : memref<128x128xbf16, #tpu.memory_space<vmem>>, vector<128x128xbf16>
    %cst = arith.constant dense<0.000000e+00> : vector<256x128xf32>
    %3 = tpu.matmul %1, %2, %cst {dimension_numbers = #tpu.dot_dimension_numbers<[1], [0], [0], [1], [0, 0, 1, 1], [], []>} : vector<256x128xbf16>, vector<128x128xbf16>, vector<256x128xf32> -> vector<256x128xf32>
    %c0_3 = arith.constant 0 : index
    %c0_4 = arith.constant 0 : index
    %4 = vector.load %arg3[%c0_3, %c0_4] : memref<1x128xf32, #tpu.memory_space<vmem>>, vector<1x128xf32>
    %5 = vector.broadcast %4 : vector<1x128xf32> to vector<256x128xf32>
    %6 = arith.addf %3, %5 : vector<256x128xf32>
    %cst_5 = arith.constant 0.000000e+00 : f32
    %7 = vector.broadcast %cst_5 : f32 to vector<256x128xf32>
    %8 = arith.maximumf %6, %7 : vector<256x128xf32>
    %9 = arith.truncf %8 : vector<256x128xf32> to vector<256x128xbf16>
    %c0_6 = arith.constant 0 : index
    %c0_7 = arith.constant 0 : index
    %10 = vector.load %arg4[%c0_6, %c0_7] : memref<128x128xbf16, #tpu.memory_space<vmem>>, vector<128x128xbf16>
    %cst_8 = arith.constant dense<0.000000e+00> : vector<256x128xf32>
    %11 = tpu.matmul %9, %10, %cst_8 {dimension_numbers = #tpu.dot_dimension_numbers<[1], [0], [0], [1], [0, 0, 1, 1], [], []>} : vector<256x128xbf16>, vector<128x128xbf16>, vector<256x128xf32> -> vector<256x128xf32>
    %c0_9 = arith.constant 0 : index
    %c0_10 = arith.constant 0 : index
    %12 = vector.load %arg5[%c0_9, %c0_10] : memref<1x128xf32, #tpu.memory_space<vmem>>, vector<1x128xf32>
    %13 = vector.broadcast %12 : vector<1x128xf32> to vector<256x128xf32>
    %14 = arith.addf %11, %13 : vector<256x128xf32>
    %cst_11 = arith.constant 0.000000e+00 : f32
    %15 = vector.broadcast %cst_11 : f32 to vector<256x128xf32>
    %16 = arith.maximumf %14, %15 : vector<256x128xf32>
    %c0_12 = arith.constant 0 : index
    %c0_13 = arith.constant 0 : index
    %17 = vector.load %arg6[%c0_12, %c0_13] : memref<128x128xf32, #tpu.memory_space<vmem>>, vector<128x128xf32>
    %cst_14 = arith.constant dense<0.000000e+00> : vector<256x128xf32>
    %18 = tpu.matmul %16, %17, %cst_14 {dimension_numbers = #tpu.dot_dimension_numbers<[1], [0], [0], [1], [0, 0, 1, 1], [], []>} : vector<256x128xf32>, vector<128x128xf32>, vector<256x128xf32> -> vector<256x128xf32>
    %c0_15 = arith.constant 0 : index
    %c0_16 = arith.constant 0 : index
    %19 = vector.load %arg7[%c0_15, %c0_16] : memref<1x128xf32, #tpu.memory_space<vmem>>, vector<1x128xf32>
    %20 = vector.broadcast %19 : vector<1x128xf32> to vector<256x128xf32>
    %21 = arith.addf %18, %20 : vector<256x128xf32>
    %c0_17 = arith.constant 0 : index
    %c0_18 = arith.constant 0 : index
    %22 = vector.load %arg8[%c0_17, %c0_18] : memref<256x128xf32, #tpu.memory_space<vmem>>, vector<256x128xf32>
    tpu.vector_store %arg8[%c0_17, %c0_18], %21 {strides = array<i32>} : memref<256x128xf32, #tpu.memory_space<vmem>>, vector<256x128xf32>,
    return
  }
  func.func @transform_0(%arg0: i32) -> (i32, i32) {
    %c0_i32 = arith.constant 0 : i32
    %c0_i32_0 = arith.constant 0 : i32
    return %arg0, %c0_i32 : i32, i32
  }
  func.func @transform_1(%arg0: i32) -> (i32, i32) {
    %c0_i32 = arith.constant 0 : i32
    %c0_i32_0 = arith.constant 0 : i32
    %c0_i32_1 = arith.constant 0 : i32
    return %c0_i32, %c0_i32_0 : i32, i32
  }
  func.func @transform_2(%arg0: i32) -> (i32, i32) {
    %c0_i32 = arith.constant 0 : i32
    %c0_i32_0 = arith.constant 0 : i32
    %c0_i32_1 = arith.constant 0 : i32
    return %c0_i32, %c0_i32_0 : i32, i32
  }
  func.func @transform_3(%arg0: i32) -> (i32, i32) {
    %c0_i32 = arith.constant 0 : i32
    %c0_i32_0 = arith.constant 0 : i32
    %c0_i32_1 = arith.constant 0 : i32
    return %c0_i32, %c0_i32_0 : i32, i32
  }
  func.func @transform_4(%arg0: i32) -> (i32, i32) {
    %c0_i32 = arith.constant 0 : i32
    %c0_i32_0 = arith.constant 0 : i32
    %c0_i32_1 = arith.constant 0 : i32
    return %c0_i32, %c0_i32_0 : i32, i32
  }
  func.func @transform_5(%arg0: i32) -> (i32, i32) {
    %c0_i32 = arith.constant 0 : i32
    %c0_i32_0 = arith.constant 0 : i32
    %c0_i32_1 = arith.constant 0 : i32
    return %c0_i32, %c0_i32_0 : i32, i32
  }
  func.func @transform_6(%arg0: i32) -> (i32, i32) {
    %c0_i32 = arith.constant 0 : i32
    %c0_i32_0 = arith.constant 0 : i32
    %c0_i32_1 = arith.constant 0 : i32
    return %c0_i32, %c0_i32_0 : i32, i32
  }
  func.func @transform_7(%arg0: i32) -> (i32, i32) {
    %c0_i32 = arith.constant 0 : i32
    %c0_i32_0 = arith.constant 0 : i32
    return %arg0, %c0_i32 : i32, i32
  }
}

</mosaic_0001>

<llo_original>
// kernel: tpu_custom_call.1
$region0: #{tpu_custom_call.1}
  #allocation0 [shape = 'u32[]', space=smem, size = 0x4, offset = 0x4, fixed_abs, tag = 'smem constant byte address 0x4 - core index']
  #allocation1 [shape = 'u32[144,128]{1,0:T(1,128)}', space=vmem, size = 0x12000, scoped, tag = 'internal scratch']
  %s0 = inlined_call_operand.hbm [shape: f32[256,128], index: 0, kind: input, shape index: {}]
  %s1 = inlined_call_operand.hbm [shape: bf16[128,128], index: 1, kind: input, shape index: {}]
  %s2 = inlined_call_operand.vmem [shape: f32[1,128], index: 2, kind: input, shape index: {}]
  %s3 = inlined_call_operand.hbm [shape: bf16[128,128], index: 3, kind: input, shape index: {}]
  %s4 = inlined_call_operand.vmem [shape: f32[1,128], index: 4, kind: input, shape index: {}]
  %s5 = inlined_call_operand.hbm [shape: f32[128,128], index: 5, kind: input, shape index: {}]
  %s6 = inlined_call_operand.vmem [shape: f32[1,128], index: 6, kind: input, shape index: {}]
  %s7 = inlined_call_operand.hbm [shape: f32[256,128], index: 7, kind: output, shape index: {}]
  %s8 = sld [smem:[#allocation0]]
  $region54: #{tpu_custom_call.1} parent=0
    _
  %s10 = ssub.s32 1, %s8
  %s11 = scalar_select 0, %s10, %s8
  $region1: #{tpu_custom_call.1} parent=0
    #allocation2 [shape = 'u8[131072]{0}', space=vmem, size = 0x20000, scoped, tag = 'input window, operand 0, single buffered']
    #allocation3 [shape = 's32[1]{0}', space=sflag, size = 0x4, scoped, tag = 'scoped memory for tpu_custom_call.1']
    #allocation4 [shape = 's32[1]{0}', space=sflag, size = 0x4, scoped, tag = 'scoped memory for tpu_custom_call.1']
    #allocation5 [shape = 'u8[32768]{0}', space=vmem, size = 0x8000, scoped, tag = 'input window, operand 1, single buffered']
    #allocation6 [shape = 's32[1]{0}', space=sflag, size = 0x4, scoped, tag = 'scoped memory for tpu_custom_call.1']
    #allocation7 [shape = 'u8[32768]{0}', space=vmem, size = 0x8000, scoped, tag = 'input window, operand 3, single buffered']
    #allocation8 [shape = 'u8[65536]{0}', space=vmem, size = 0x10000, scoped, tag = 'input window, operand 5, single buffered']
    #allocation9 [shape = 's32[1]{0}', space=sflag, size = 0x4, scoped, tag = 'scoped memory for tpu_custom_call.1']
    #allocation10 [shape = 'u8[131072]{0}', space=vmem, size = 0x20000, scoped, tag = 'output window, operand 0, single buffered']
    %12 = vsyncpa [#allocation3], 0
    %13 = vsyncpa [#allocation6], 0
    %14 = vsyncpa [#allocation9], 0
    %15 = vsyncpa [#allocation4], 0
    // Predicated region
    $region2: #{tpu_custom_call.1} parent=1 // pred_check
      _
    $region3: #{tpu_custom_call.1} parent=1 // pred_check_branch
      %17 = sbr.rel (0) target = $region5
    $region4: #{tpu_custom_call.1} parent=1 // pred_region
      %s19 = ssub.s32 4096, 4096
      %20 = vsyncadd [#allocation3], %s19
      %s21 = sshll.u32 [#allocation2], 4
      %s22 = int_to_ptr.vmem [resolvable:$true] %s21
      %27 = dma.hbm_to_vmem [thread:$0]  %s0, 4096, %s22, [#allocation3], 128, 128, 8
    $region5: #{tpu_custom_call.1} parent=1 // pred_fallthru
      _
    // Predicated region
    $region6: #{tpu_custom_call.1} parent=1 // pred_check
      _
    $region7: #{tpu_custom_call.1} parent=1 // pred_check_branch
      %29 = sbr.rel (0) target = $region9
    $region8: #{tpu_custom_call.1} parent=1 // pred_region
      %s31 = ssub.s32 1024, 1024
      %32 = vsyncadd [#allocation6], %s31
      %s33 = sshll.u32 [#allocation5], 4
      %s34 = int_to_ptr.vmem [resolvable:$true] %s33
      %39 = dma.hbm_to_vmem [thread:$0]  %s1, 1024, %s34, [#allocation6], 64, 64, 4
    $region9: #{tpu_custom_call.1} parent=1 // pred_fallthru
      _
    // Predicated region
    $region10: #{tpu_custom_call.1} parent=1 // pred_check
      _
    $region11: #{tpu_custom_call.1} parent=1 // pred_check_branch
      %41 = sbr.rel (0) target = $region13
    $region12: #{tpu_custom_call.1} parent=1 // pred_region
      _
    $region13: #{tpu_custom_call.1} parent=1 // pred_fallthru
      _
    // Predicated region
    $region14: #{tpu_custom_call.1} parent=1 // pred_check
      _
    $region15: #{tpu_custom_call.1} parent=1 // pred_check_branch
      %43 = sbr.rel (0) target = $region17
    $region16: #{tpu_custom_call.1} parent=1 // pred_region
      %s45 = ssub.s32 1024, 1024
      %46 = vsyncadd [#allocation6], %s45
      %s47 = sshll.u32 [#allocation7], 4
      %s48 = int_to_ptr.vmem [resolvable:$true] %s47
      %53 = dma.hbm_to_vmem [thread:$0]  %s3, 1024, %s48, [#allocation6], 64, 64, 4
    $region17: #{tpu_custom_call.1} parent=1 // pred_fallthru
      _
    // Predicated region
    $region18: #{tpu_custom_call.1} parent=1 // pred_check
      _
    $region19: #{tpu_custom_call.1} parent=1 // pred_check_branch
      %55 = sbr.rel (0) target = $region21
    $region20: #{tpu_custom_call.1} parent=1 // pred_region
      _
    $region21: #{tpu_custom_call.1} parent=1 // pred_fallthru
      _
    // Predicated region
    $region22: #{tpu_custom_call.1} parent=1 // pred_check
      _
    $region23: #{tpu_custom_call.1} parent=1 // pred_check_branch
      %57 = sbr.rel (0) target = $region25
    $region24: #{tpu_custom_call.1} parent=1 // pred_region
      %s59 = ssub.s32 2048, 2048
      %60 = vsyncadd [#allocation9], %s59
      %s61 = sshll.u32 [#allocation8], 4
      %s62 = int_to_ptr.vmem [resolvable:$true] %s61
      %67 = dma.hbm_to_vmem [thread:$0]  %s5, 2048, %s62, [#allocation9], 128, 128, 8
    $region25: #{tpu_custom_call.1} parent=1 // pred_fallthru
      _
    // Predicated region
    $region26: #{tpu_custom_call.1} parent=1 // pred_check
      _
    $region27: #{tpu_custom_call.1} parent=1 // pred_check_branch
      %69 = sbr.rel (0) target = $region29
    $region28: #{tpu_custom_call.1} parent=1 // pred_region
      _
    $region29: #{tpu_custom_call.1} parent=1 // pred_fallthru
      _
    // Predicated region
    $region30: #{tpu_custom_call.1} parent=1 // pred_check
      _
    $region31: #{tpu_custom_call.1} parent=1 // pred_check_branch
      %71 = sbr.rel (0) target = $region33
    $region32: #{tpu_custom_call.1} parent=1 // pred_region
      %72 = dma.done [#allocation3], 4096
    $region33: #{tpu_custom_call.1} parent=1 // pred_fallthru
      _
    // Predicated region
    $region34: #{tpu_custom_call.1} parent=1 // pred_check
      _
    $region35: #{tpu_custom_call.1} parent=1 // pred_check_branch
      %74 = sbr.rel (0) target = $region37
    $region36: #{tpu_custom_call.1} parent=1 // pred_region
      %75 = dma.done [#allocation6], 1024
    $region37: #{tpu_custom_call.1} parent=1 // pred_fallthru
      _
    // Predicated region
    $region38: #{tpu_custom_call.1} parent=1 // pred_check
      _
    $region39: #{tpu_custom_call.1} parent=1 // pred_check_branch
      %77 = sbr.rel (0) target = $region41
    $region40: #{tpu_custom_call.1} parent=1 // pred_region
      %78 = dma.done [#allocation6], 1024
    $region41: #{tpu_custom_call.1} parent=1 // pred_fallthru
      _
    // Predicated region
    $region42: #{tpu_custom_call.1} parent=1 // pred_check
      _
    $region43: #{tpu_custom_call.1} parent=1 // pred_check_branch
      %80 = sbr.rel (0) target = $region45
    $region44: #{tpu_custom_call.1} parent=1 // pred_region
      %81 = dma.done [#allocation9], 2048
    $region45: #{tpu_custom_call.1} parent=1 // pred_fallthru
      _
    %v83 = vld [vmem:[#allocation2] sm:$0xff]
    %v84 = vld [vmem:[#allocation2 + $0x8] sm:$0xff]
    %v85 = vld [vmem:[#allocation2 + $0x10] sm:$0xff]
    %v86 = vld [vmem:[#allocation2 + $0x18] sm:$0xff]
    %v87 = vld [vmem:[#allocation2 + $0x20] sm:$0xff]
    %v88 = vld [vmem:[#allocation2 + $0x28] sm:$0xff]
    %v89 = vld [vmem:[#allocation2 + $0x30] sm:$0xff]
    %v90 = vld [vmem:[#allocation2 + $0x38] sm:$0xff]
    %v91 = vld [vmem:[#allocation2 + $0x40] sm:$0xff]
    %v92 = vld [vmem:[#allocation2 + $0x48] sm:$0xff]
    %v93 = vld [vmem:[#allocation2 + $0x50] sm:$0xff]
    %v94 = vld [vmem:[#allocation2 + $0x58] sm:$0xff]
    %v95 = vld [vmem:[#allocation2 + $0x60] sm:$0xff]
    %v96 = vld [vmem:[#allocation2 + $0x68] sm:$0xff]
    %v97 = vld [vmem:[#allocation2 + $0x70] sm:$0xff]
    %v98 = vld [vmem:[#allocation2 + $0x78] sm:$0xff]
    %v99 = vld [vmem:[#allocation2 + $0x80] sm:$0xff]
    %v100 = vld [vmem:[#allocation2 + $0x88] sm:$0xff]
    %v101 = vld [vmem:[#allocation2 + $0x90] sm:$0xff]
    %v102 = vld [vmem:[#allocation2 + $0x98] sm:$0xff]
    %v103 = vld [vmem:[#allocation2 + $0xa0] sm:$0xff]
    %v104 = vld [vmem:[#allocation2 + $0xa8] sm:$0xff]
    %v105 = vld [vmem:[#allocation2 + $0xb0] sm:$0xff]
    %v106 = vld [vmem:[#allocation2 + $0xb8] sm:$0xff]
    %v107 = vld [vmem:[#allocation2 + $0xc0] sm:$0xff]
    %v108 = vld [vmem:[#allocation2 + $0xc8] sm:$0xff]
    %v109 = vld [vmem:[#allocation2 + $0xd0] sm:$0xff]
    %v110 = vld [vmem:[#allocation2 + $0xd8] sm:$0xff]
    %v111 = vld [vmem:[#allocation2 + $0xe0] sm:$0xff]
    %v112 = vld [vmem:[#allocation2 + $0xe8] sm:$0xff]
    %v113 = vld [vmem:[#allocation2 + $0xf0] sm:$0xff]
    %v114 = vld [vmem:[#allocation2 + $0xf8] sm:$0xff]
    %v115 = vpack.c.bf16 %v84, %v83
    %v116 = vpack.c.bf16 %v86, %v85
    %v117 = vpack.c.bf16 %v88, %v87
    %v118 = vpack.c.bf16 %v90, %v89
    %v119 = vpack.c.bf16 %v92, %v91
    %v120 = vpack.c.bf16 %v94, %v93
    %v121 = vpack.c.bf16 %v96, %v95
    %v122 = vpack.c.bf16 %v98, %v97
    %v123 = vpack.c.bf16 %v100, %v99
    %v124 = vpack.c.bf16 %v102, %v101
    %v125 = vpack.c.bf16 %v104, %v103
    %v126 = vpack.c.bf16 %v106, %v105
    %v127 = vpack.c.bf16 %v108, %v107
    %v128 = vpack.c.bf16 %v110, %v109
    %v129 = vpack.c.bf16 %v112, %v111
    %v130 = vpack.c.bf16 %v114, %v113
    %v131 = vld [vmem:[#allocation5] sm:$0xf]
    %v132 = vld [vmem:[#allocation5 + $0x4] sm:$0xf]
    %v133 = vld [vmem:[#allocation5 + $0x8] sm:$0xf]
    %v134 = vld [vmem:[#allocation5 + $0xc] sm:$0xf]
    %v135 = vld [vmem:[#allocation5 + $0x10] sm:$0xf]
    %v136 = vld [vmem:[#allocation5 + $0x14] sm:$0xf]
    %v137 = vld [vmem:[#allocation5 + $0x18] sm:$0xf]
    %v138 = vld [vmem:[#allocation5 + $0x1c] sm:$0xf]
    %v139 = vld [vmem:[#allocation5 + $0x20] sm:$0xf]
    %v140 = vld [vmem:[#allocation5 + $0x24] sm:$0xf]
    %v141 = vld [vmem:[#allocation5 + $0x28] sm:$0xf]
    %v142 = vld [vmem:[#allocation5 + $0x2c] sm:$0xf]
    %v143 = vld [vmem:[#allocation5 + $0x30] sm:$0xf]
    %v144 = vld [vmem:[#allocation5 + $0x34] sm:$0xf]
    %v145 = vld [vmem:[#allocation5 + $0x38] sm:$0xf]
    %v146 = vld [vmem:[#allocation5 + $0x3c] sm:$0xf]
    %v147 = vld [vmem:[%s2] sm:$0x1]
    %v149 = vlaneseq
    %v150 = vshrl.u32 %v149, 7
    %v151 = vsub.s32 0, %v150
    %v152 = vrot.slane %v147, %v151
    %v170 = vunpack.c.l.b16 %v131
    %v171 = vunpack.c.l.b16 %v132
    %v172 = vunpack.c.l.b16 %v133
    %v173 = vunpack.c.l.b16 %v134
    %v174 = vunpack.c.l.b16 %v135
    %v175 = vunpack.c.l.b16 %v136
    %v176 = vunpack.c.l.b16 %v137
    %v177 = vunpack.c.l.b16 %v138
    %v178 = vunpack.c.l.b16 %v139
    %v179 = vunpack.c.l.b16 %v140
    %v180 = vunpack.c.l.b16 %v141
    %v181 = vunpack.c.l.b16 %v142
    %v182 = vunpack.c.l.b16 %v143
    %v183 = vunpack.c.l.b16 %v144
    %v184 = vunpack.c.l.b16 %v145
    %v185 = vunpack.c.l.b16 %v146
    %v186 = vpack.c.b16 %v171, %v170
    %v187 = vpack.c.b16 %v173, %v172
    %v188 = vpack.c.b16 %v175, %v174
    %v189 = vpack.c.b16 %v177, %v176
    %v190 = vpack.c.b16 %v179, %v178
    %v191 = vpack.c.b16 %v181, %v180
    %v192 = vpack.c.b16 %v183, %v182
    %v193 = vpack.c.b16 %v185, %v184
    %202 = vmatprep.subr.bf16.mxu0 0
    %203 = vmatpush1.bf16.msra.mxu0 %v186
    %204 = vmatprep.subr.bf16.mxu0 0
    %205 = vmatpush1.bf16.msra.mxu0 %v187
    %206 = vmatprep.subr.bf16.mxu0 0
    %207 = vmatpush1.bf16.msra.mxu0 %v188
    %208 = vmatprep.subr.bf16.mxu0 0
    %209 = vmatpush1.bf16.msra.mxu0 %v189
    %210 = vmatprep.subr.bf16.mxu0 0
    %211 = vmatpush1.bf16.msra.mxu0 %v190
    %212 = vmatprep.subr.bf16.mxu0 0
    %213 = vmatpush1.bf16.msra.mxu0 %v191
    %214 = vmatprep.subr.bf16.mxu0 0
    %215 = vmatpush1.bf16.msra.mxu0 %v192
    %216 = vmatprep.subr.bf16.mxu0 0
    %217 = vmatpush1.bf16.msra.mxu0 %v193
    %218 = vmatprep.subr.bf16.mxu0 0
    %219 = vmatpush1.bf16.msra.mxu0 0
    %220 = vmatprep.subr.bf16.mxu0 0
    %221 = vmatpush1.bf16.msra.mxu0 0
    %222 = vmatprep.subr.bf16.mxu0 0
    %223 = vmatpush1.bf16.msra.mxu0 0
    %224 = vmatprep.subr.bf16.mxu0 0
    %225 = vmatpush1.bf16.msra.mxu0 0
    %226 = vmatprep.subr.bf16.mxu0 0
    %227 = vmatpush1.bf16.msra.mxu0 0
    %228 = vmatprep.subr.bf16.mxu0 0
    %229 = vmatpush1.bf16.msra.mxu0 0
    %230 = vmatprep.subr.bf16.mxu0 0
    %231 = vmatpush1.bf16.msra.mxu0 0
    %232 = vmatprep.subr.bf16.mxu0 0
    %233 = vmatpush1.bf16.msra.mxu0 0
    %234 = vmatprep.mubr.bf16.mxu0 0
    %235 = vmatmul.mubr.bf16.gmra.mrb[0].mxu0 %v115
    %v236 = vpop.f32.mrb[0].mxu0
    %v237 = vadd.f32 %v152, %v236
    %v238 = vpop.f32.mrb[0].mxu0
    %v239 = vpop.f32.mrb[0].mxu0
    %v240 = vadd.f32 %v152, %v239
    %v241 = vpop.f32.mrb[0].mxu0
    %242 = vmatprep.mubr.bf16.mxu0 0
    %243 = vmatmul.mubr.bf16.gmra.mrb[0].mxu0 %v116
    %v244 = vpop.f32.mrb[0].mxu0
    %v245 = vadd.f32 %v152, %v244
    %v246 = vpop.f32.mrb[0].mxu0
    %v247 = vpop.f32.mrb[0].mxu0
    %v248 = vadd.f32 %v152, %v247
    %v249 = vpop.f32.mrb[0].mxu0
    %250 = vmatprep.mubr.bf16.mxu0 0
    %251 = vmatmul.mubr.bf16.gmra.mrb[0].mxu0 %v117
    %v252 = vpop.f32.mrb[0].mxu0
    %v253 = vadd.f32 %v152, %v252
    %v254 = vpop.f32.mrb[0].mxu0
    %v255 = vpop.f32.mrb[0].mxu0
    %v256 = vadd.f32 %v152, %v255
    %v257 = vpop.f32.mrb[0].mxu0
    %258 = vmatprep.mubr.bf16.mxu0 0
    %259 = vmatmul.mubr.bf16.gmra.mrb[0].mxu0 %v118
    %v260 = vpop.f32.mrb[0].mxu0
    %v261 = vadd.f32 %v152, %v260
    %v262 = vpop.f32.mrb[0].mxu0
    %v263 = vpop.f32.mrb[0].mxu0
    %v264 = vadd.f32 %v152, %v263
    %v265 = vpop.f32.mrb[0].mxu0
    %266 = vmatprep.mubr.bf16.mxu0 0
    %267 = vmatmul.mubr.bf16.gmra.mrb[0].mxu0 %v119
    %v268 = vpop.f32.mrb[0].mxu0
    %v269 = vadd.f32 %v152, %v268
    %v270 = vpop.f32.mrb[0].mxu0
    %v271 = vpop.f32.mrb[0].mxu0
    %v272 = vadd.f32 %v152, %v271
    %v273 = vpop.f32.mrb[0].mxu0
    %274 = vmatprep.mubr.bf16.mxu0 0
    %275 = vmatmul.mubr.bf16.gmra.mrb[0].mxu0 %v120
    %v276 = vpop.f32.mrb[0].mxu0
    %v277 = vadd.f32 %v152, %v276
    %v278 = vpop.f32.mrb[0].mxu0
    %v279 = vpop.f32.mrb[0].mxu0
    %v280 = vadd.f32 %v152, %v279
    %v281 = vpop.f32.mrb[0].mxu0
    %282 = vmatprep.mubr.bf16.mxu0 0
    %283 = vmatmul.mubr.bf16.gmra.mrb[0].mxu0 %v121
    %v284 = vpop.f32.mrb[0].mxu0
    %v285 = vadd.f32 %v152, %v284
    %v286 = vpop.f32.mrb[0].mxu0
    %v287 = vpop.f32.mrb[0].mxu0
    %v288 = vadd.f32 %v152, %v287
    %v289 = vpop.f32.mrb[0].mxu0
    %290 = vmatprep.mubr.bf16.mxu0 0
    %291 = vmatmul.mubr.bf16.gmra.mrb[0].mxu0 %v122
    %v292 = vpop.f32.mrb[0].mxu0
    %v293 = vadd.f32 %v152, %v292
    %v294 = vpop.f32.mrb[0].mxu0
    %v295 = vpop.f32.mrb[0].mxu0
    %v296 = vadd.f32 %v152, %v295
    %v297 = vpop.f32.mrb[0].mxu0
    %298 = vmatprep.mubr.bf16.mxu0 0
    %299 = vmatmul.mubr.bf16.gmra.mrb[0].mxu0 %v123
    %v300 = vpop.f32.mrb[0].mxu0
    %v301 = vadd.f32 %v152, %v300
    %v302 = vpop.f32.mrb[0].mxu0
    %v303 = vpop.f32.mrb[0].mxu0
    %v304 = vadd.f32 %v152, %v303
    %v305 = vpop.f32.mrb[0].mxu0
    %306 = vmatprep.mubr.bf16.mxu0 0
    %307 = vmatmul.mubr.bf16.gmra.mrb[0].mxu0 %v124
    %v308 = vpop.f32.mrb[0].mxu0
    %v309 = vadd.f32 %v152, %v308
    %v310 = vpop.f32.mrb[0].mxu0
    %v311 = vpop.f32.mrb[0].mxu0
    %v312 = vadd.f32 %v152, %v311
    %v313 = vpop.f32.mrb[0].mxu0
    %314 = vmatprep.mubr.bf16.mxu0 0
    %315 = vmatmul.mubr.bf16.gmra.mrb[0].mxu0 %v125
    %v316 = vpop.f32.mrb[0].mxu0
    %v317 = vadd.f32 %v152, %v316
    %v318 = vpop.f32.mrb[0].mxu0
    %v319 = vpop.f32.mrb[0].mxu0
    %v320 = vadd.f32 %v152, %v319
    %v321 = vpop.f32.mrb[0].mxu0
    %322 = vmatprep.mubr.bf16.mxu0 0
    %323 = vmatmul.mubr.bf16.gmra.mrb[0].mxu0 %v126
    %v324 = vpop.f32.mrb[0].mxu0
    %v325 = vadd.f32 %v152, %v324
    %v326 = vpop.f32.mrb[0].mxu0
    %v327 = vpop.f32.mrb[0].mxu0
    %v328 = vadd.f32 %v152, %v327
    %v329 = vpop.f32.mrb[0].mxu0
    %330 = vmatprep.mubr.bf16.mxu0 0
    %331 = vmatmul.mubr.bf16.gmra.mrb[0].mxu0 %v127
    %v332 = vpop.f32.mrb[0].mxu0
    %v333 = vadd.f32 %v152, %v332
    %v334 = vpop.f32.mrb[0].mxu0
    %v335 = vpop.f32.mrb[0].mxu0
    %v336 = vadd.f32 %v152, %v335
    %v337 = vpop.f32.mrb[0].mxu0
    %338 = vmatprep.mubr.bf16.mxu0 0
    %339 = vmatmul.mubr.bf16.gmra.mrb[0].mxu0 %v128
    %v340 = vpop.f32.mrb[0].mxu0
    %v341 = vadd.f32 %v152, %v340
    %v342 = vpop.f32.mrb[0].mxu0
    %v343 = vpop.f32.mrb[0].mxu0
    %v344 = vadd.f32 %v152, %v343
    %v345 = vpop.f32.mrb[0].mxu0
    %346 = vmatprep.mubr.bf16.mxu0 0
    %347 = vmatmul.mubr.bf16.gmra.mrb[0].mxu0 %v129
    %v348 = vpop.f32.mrb[0].mxu0
    %v349 = vadd.f32 %v152, %v348
    %v350 = vpop.f32.mrb[0].mxu0
    %v351 = vpop.f32.mrb[0].mxu0
    %v352 = vadd.f32 %v152, %v351
    %v353 = vpop.f32.mrb[0].mxu0
    %354 = vmatprep.mubr.bf16.mxu0 0
    %355 = vmatmul.mubr.bf16.gmra.mrb[0].mxu0 %v130
    %v356 = vpop.f32.mrb[0].mxu0
    %v357 = vadd.f32 %v152, %v356
    %v358 = vpop.f32.mrb[0].mxu0
    %v359 = vpop.f32.mrb[0].mxu0
    %v360 = vadd.f32 %v152, %v359
    %v361 = vpop.f32.mrb[0].mxu0
    %362 = vdwg.mxu0
    %v363 = vmax.f32 %v237, 0.0
    %v364 = vmax.f32 %v240, 0.0
    %v365 = vmax.f32 %v245, 0.0
    %v366 = vmax.f32 %v248, 0.0
    %v367 = vmax.f32 %v253, 0.0
    %v368 = vmax.f32 %v256, 0.0
    %v369 = vmax.f32 %v261, 0.0
    %v370 = vmax.f32 %v264, 0.0
    %v371 = vmax.f32 %v269, 0.0
    %v372 = vmax.f32 %v272, 0.0
    %v373 = vmax.f32 %v277, 0.0
    %v374 = vmax.f32 %v280, 0.0
    %v375 = vmax.f32 %v285, 0.0
    %v376 = vmax.f32 %v288, 0.0
    %v377 = vmax.f32 %v293, 0.0
    %v378 = vmax.f32 %v296, 0.0
    %v379 = vmax.f32 %v301, 0.0
    %v380 = vmax.f32 %v304, 0.0
    %v381 = vmax.f32 %v309, 0.0
    %v382 = vmax.f32 %v312, 0.0
    %v383 = vmax.f32 %v317, 0.0
    %v384 = vmax.f32 %v320, 0.0
    %v385 = vmax.f32 %v325, 0.0
    %v386 = vmax.f32 %v328, 0.0
    %v387 = vmax.f32 %v333, 0.0
    %v388 = vmax.f32 %v336, 0.0
    %v389 = vmax.f32 %v341, 0.0
    %v390 = vmax.f32 %v344, 0.0
    %v391 = vmax.f32 %v349, 0.0
    %v392 = vmax.f32 %v352, 0.0
    %v393 = vmax.f32 %v357, 0.0
    %v394 = vmax.f32 %v360, 0.0
    %v395 = vpack.c.bf16 %v364, %v363
    %v396 = vpack.c.bf16 %v366, %v365
    %v397 = vpack.c.bf16 %v368, %v367
    %v398 = vpack.c.bf16 %v370, %v369
    %v399 = vpack.c.bf16 %v372, %v371
    %v400 = vpack.c.bf16 %v374, %v373
    %v401 = vpack.c.bf16 %v376, %v375
    %v402 = vpack.c.bf16 %v378, %v377
    %v403 = vpack.c.bf16 %v380, %v379
    %v404 = vpack.c.bf16 %v382, %v381
    %v405 = vpack.c.bf16 %v384, %v383
    %v406 = vpack.c.bf16 %v386, %v385
    %v407 = vpack.c.bf16 %v388, %v387
    %v408 = vpack.c.bf16 %v390, %v389
    %v409 = vpack.c.bf16 %v392, %v391
    %v410 = vpack.c.bf16 %v394, %v393
    %v411 = vld [vmem:[#allocation7] sm:$0xf]
    %v412 = vld [vmem:[#allocation7 + $0x4] sm:$0xf]
    %v413 = vld [vmem:[#allocation7 + $0x8] sm:$0xf]
    %v414 = vld [vmem:[#allocation7 + $0xc] sm:$0xf]
    %v415 = vld [vmem:[#allocation7 + $0x10] sm:$0xf]
    %v416 = vld [vmem:[#allocation7 + $0x14] sm:$0xf]
    %v417 = vld [vmem:[#allocation7 + $0x18] sm:$0xf]
    %v418 = vld [vmem:[#allocation7 + $0x1c] sm:$0xf]
    %v419 = vld [vmem:[#allocation7 + $0x20] sm:$0xf]
    %v420 = vld [vmem:[#allocation7 + $0x24] sm:$0xf]
    %v421 = vld [vmem:[#allocation7 + $0x28] sm:$0xf]
    %v422 = vld [vmem:[#allocation7 + $0x2c] sm:$0xf]
    %v423 = vld [vmem:[#allocation7 + $0x30] sm:$0xf]
    %v424 = vld [vmem:[#allocation7 + $0x34] sm:$0xf]
    %v425 = vld [vmem:[#allocation7 + $0x38] sm:$0xf]
    %v426 = vld [vmem:[#allocation7 + $0x3c] sm:$0xf]
    %v427 = vld [vmem:[%s4] sm:$0x1]
    %v429 = vlaneseq
    %v430 = vshrl.u32 %v429, 7
    %v431 = vsub.s32 0, %v430
    %v432 = vrot.slane %v427, %v431
    %v450 = vunpack.c.l.b16 %v411
    %v451 = vunpack.c.l.b16 %v412
    %v452 = vunpack.c.l.b16 %v413
    %v453 = vunpack.c.l.b16 %v414
    %v454 = vunpack.c.l.b16 %v415
    %v455 = vunpack.c.l.b16 %v416
    %v456 = vunpack.c.l.b16 %v417
    %v457 = vunpack.c.l.b16 %v418
    %v458 = vunpack.c.l.b16 %v419
    %v459 = vunpack.c.l.b16 %v420
    %v460 = vunpack.c.l.b16 %v421
    %v461 = vunpack.c.l.b16 %v422
    %v462 = vunpack.c.l.b16 %v423
    %v463 = vunpack.c.l.b16 %v424
    %v464 = vunpack.c.l.b16 %v425
    %v465 = vunpack.c.l.b16 %v426
    %v466 = vpack.c.b16 %v451, %v450
    %v467 = vpack.c.b16 %v453, %v452
    %v468 = vpack.c.b16 %v455, %v454
    %v469 = vpack.c.b16 %v457, %v456
    %v470 = vpack.c.b16 %v459, %v458
    %v471 = vpack.c.b16 %v461, %v460
    %v472 = vpack.c.b16 %v463, %v462
    %v473 = vpack.c.b16 %v465, %v464
    %482 = vmatprep.subr.bf16.mxu0 0
    %483 = vmatpush1.bf16.msra.mxu0 %v466
    %484 = vmatprep.subr.bf16.mxu0 0
    %485 = vmatpush1.bf16.msra.mxu0 %v467
    %486 = vmatprep.subr.bf16.mxu0 0
    %487 = vmatpush1.bf16.msra.mxu0 %v468
    %488 = vmatprep.subr.bf16.mxu0 0
    %489 = vmatpush1.bf16.msra.mxu0 %v469
    %490 = vmatprep.subr.bf16.mxu0 0
    %491 = vmatpush1.bf16.msra.mxu0 %v470
    %492 = vmatprep.subr.bf16.mxu0 0
    %493 = vmatpush1.bf16.msra.mxu0 %v471
    %494 = vmatprep.subr.bf16.mxu0 0
    %495 = vmatpush1.bf16.msra.mxu0 %v472
    %496 = vmatprep.subr.bf16.mxu0 0
    %497 = vmatpush1.bf16.msra.mxu0 %v473
    %498 = vmatprep.subr.bf16.mxu0 0
    %499 = vmatpush1.bf16.msra.mxu0 0
    %500 = vmatprep.subr.bf16.mxu0 0
    %501 = vmatpush1.bf16.msra.mxu0 0
    %502 = vmatprep.subr.bf16.mxu0 0
    %503 = vmatpush1.bf16.msra.mxu0 0
    %504 = vmatprep.subr.bf16.mxu0 0
    %505 = vmatpush1.bf16.msra.mxu0 0
    %506 = vmatprep.subr.bf16.mxu0 0
    %507 = vmatpush1.bf16.msra.mxu0 0
    %508 = vmatprep.subr.bf16.mxu0 0
    %509 = vmatpush1.bf16.msra.mxu0 0
    %510 = vmatprep.subr.bf16.mxu0 0
    %511 = vmatpush1.bf16.msra.mxu0 0
    %512 = vmatprep.subr.bf16.mxu0 0
    %513 = vmatpush1.bf16.msra.mxu0 0
    %514 = vmatprep.mubr.bf16.mxu0 0
    %515 = vmatmul.mubr.bf16.gmra.mrb[0].mxu0 %v395
    %v516 = vpop.f32.mrb[0].mxu0
    %v517 = vadd.f32 %v432, %v516
    %v518 = vpop.f32.mrb[0].mxu0
    %v519 = vpop.f32.mrb[0].mxu0
    %v520 = vadd.f32 %v432, %v519
    %v521 = vpop.f32.mrb[0].mxu0
    %522 = vmatprep.mubr.bf16.mxu0 0
    %523 = vmatmul.mubr.bf16.gmra.mrb[0].mxu0 %v396
    %v524 = vpop.f32.mrb[0].mxu0
    %v525 = vadd.f32 %v432, %v524
    %v526 = vpop.f32.mrb[0].mxu0
    %v527 = vpop.f32.mrb[0].mxu0
    %v528 = vadd.f32 %v432, %v527
    %v529 = vpop.f32.mrb[0].mxu0
    %530 = vmatprep.mubr.bf16.mxu0 0
    %531 = vmatmul.mubr.bf16.gmra.mrb[0].mxu0 %v397
    %v532 = vpop.f32.mrb[0].mxu0
    %v533 = vadd.f32 %v432, %v532
    %v534 = vpop.f32.mrb[0].mxu0
    %v535 = vpop.f32.mrb[0].mxu0
    %v536 = vadd.f32 %v432, %v535
    %v537 = vpop.f32.mrb[0].mxu0
    %538 = vmatprep.mubr.bf16.mxu0 0
    %539 = vmatmul.mubr.bf16.gmra.mrb[0].mxu0 %v398
    %v540 = vpop.f32.mrb[0].mxu0
    %v541 = vadd.f32 %v432, %v540
    %v542 = vpop.f32.mrb[0].mxu0
    %v543 = vpop.f32.mrb[0].mxu0
    %v544 = vadd.f32 %v432, %v543
    %v545 = vpop.f32.mrb[0].mxu0
    %546 = vmatprep.mubr.bf16.mxu0 0
    %547 = vmatmul.mubr.bf16.gmra.mrb[0].mxu0 %v399
    %v548 = vpop.f32.mrb[0].mxu0
    %v549 = vadd.f32 %v432, %v548
    %v550 = vpop.f32.mrb[0].mxu0
    %v551 = vpop.f32.mrb[0].mxu0
    %v552 = vadd.f32 %v432, %v551
    %v553 = vpop.f32.mrb[0].mxu0
    %554 = vmatprep.mubr.bf16.mxu0 0
    %555 = vmatmul.mubr.bf16.gmra.mrb[0].mxu0 %v400
    %v556 = vpop.f32.mrb[0].mxu0
    %v557 = vadd.f32 %v432, %v556
    %v558 = vpop.f32.mrb[0].mxu0
    %v559 = vpop.f32.mrb[0].mxu0
    %v560 = vadd.f32 %v432, %v559
    %v561 = vpop.f32.mrb[0].mxu0
    %562 = vmatprep.mubr.bf16.mxu0 0
    %563 = vmatmul.mubr.bf16.gmra.mrb[0].mxu0 %v401
    %v564 = vpop.f32.mrb[0].mxu0
    %v565 = vadd.f32 %v432, %v564
    %v566 = vpop.f32.mrb[0].mxu0
    %v567 = vpop.f32.mrb[0].mxu0
    %v568 = vadd.f32 %v432, %v567
    %v569 = vpop.f32.mrb[0].mxu0
    %570 = vmatprep.mubr.bf16.mxu0 0
    %571 = vmatmul.mubr.bf16.gmra.mrb[0].mxu0 %v402
    %v572 = vpop.f32.mrb[0].mxu0
    %v573 = vadd.f32 %v432, %v572
    %v574 = vpop.f32.mrb[0].mxu0
    %v575 = vpop.f32.mrb[0].mxu0
    %v576 = vadd.f32 %v432, %v575
    %v577 = vpop.f32.mrb[0].mxu0
    %578 = vmatprep.mubr.bf16.mxu0 0
    %579 = vmatmul.mubr.bf16.gmra.mrb[0].mxu0 %v403
    %v580 = vpop.f32.mrb[0].mxu0
    %v581 = vadd.f32 %v432, %v580
    %v582 = vpop.f32.mrb[0].mxu0
    %v583 = vpop.f32.mrb[0].mxu0
    %v584 = vadd.f32 %v432, %v583
    %v585 = vpop.f32.mrb[0].mxu0
    %586 = vmatprep.mubr.bf16.mxu0 0
    %587 = vmatmul.mubr.bf16.gmra.mrb[0].mxu0 %v404
    %v588 = vpop.f32.mrb[0].mxu0
    %v589 = vadd.f32 %v432, %v588
    %v590 = vpop.f32.mrb[0].mxu0
    %v591 = vpop.f32.mrb[0].mxu0
    %v592 = vadd.f32 %v432, %v591
    %v593 = vpop.f32.mrb[0].mxu0
    %594 = vmatprep.mubr.bf16.mxu0 0
    %595 = vmatmul.mubr.bf16.gmra.mrb[0].mxu0 %v405
    %v596 = vpop.f32.mrb[0].mxu0
    %v597 = vadd.f32 %v432, %v596
    %v598 = vpop.f32.mrb[0].mxu0
    %v599 = vpop.f32.mrb[0].mxu0
    %v600 = vadd.f32 %v432, %v599
    %v601 = vpop.f32.mrb[0].mxu0
    %602 = vmatprep.mubr.bf16.mxu0 0
    %603 = vmatmul.mubr.bf16.gmra.mrb[0].mxu0 %v406
    %v604 = vpop.f32.mrb[0].mxu0
    %v605 = vadd.f32 %v432, %v604
    %v606 = vpop.f32.mrb[0].mxu0
    %v607 = vpop.f32.mrb[0].mxu0
    %v608 = vadd.f32 %v432, %v607
    %v609 = vpop.f32.mrb[0].mxu0
    %610 = vmatprep.mubr.bf16.mxu0 0
    %611 = vmatmul.mubr.bf16.gmra.mrb[0].mxu0 %v407
    %v612 = vpop.f32.mrb[0].mxu0
    %v613 = vadd.f32 %v432, %v612
    %v614 = vpop.f32.mrb[0].mxu0
    %v615 = vpop.f32.mrb[0].mxu0
    %v616 = vadd.f32 %v432, %v615
    %v617 = vpop.f32.mrb[0].mxu0
    %618 = vmatprep.mubr.bf16.mxu0 0
    %619 = vmatmul.mubr.bf16.gmra.mrb[0].mxu0 %v408
    %v620 = vpop.f32.mrb[0].mxu0
    %v621 = vadd.f32 %v432, %v620
    %v622 = vpop.f32.mrb[0].mxu0
    %v623 = vpop.f32.mrb[0].mxu0
    %v624 = vadd.f32 %v432, %v623
    %v625 = vpop.f32.mrb[0].mxu0
    %626 = vmatprep.mubr.bf16.mxu0 0
    %627 = vmatmul.mubr.bf16.gmra.mrb[0].mxu0 %v409
    %v628 = vpop.f32.mrb[0].mxu0
    %v629 = vadd.f32 %v432, %v628
    %v630 = vpop.f32.mrb[0].mxu0
    %v631 = vpop.f32.mrb[0].mxu0
    %v632 = vadd.f32 %v432, %v631
    %v633 = vpop.f32.mrb[0].mxu0
    %634 = vmatprep.mubr.bf16.mxu0 0
    %635 = vmatmul.mubr.bf16.gmra.mrb[0].mxu0 %v410
    %v636 = vpop.f32.mrb[0].mxu0
    %v637 = vadd.f32 %v432, %v636
    %v638 = vpop.f32.mrb[0].mxu0
    %v639 = vpop.f32.mrb[0].mxu0
    %v640 = vadd.f32 %v432, %v639
    %v641 = vpop.f32.mrb[0].mxu0
    %642 = vdwg.mxu0
    %v643 = vmax.f32 %v517, 0.0
    %v644 = vmax.f32 %v520, 0.0
    %v645 = vmax.f32 %v525, 0.0
    %v646 = vmax.f32 %v528, 0.0
    %v647 = vmax.f32 %v533, 0.0
    %v648 = vmax.f32 %v536, 0.0
    %v649 = vmax.f32 %v541, 0.0
    %v650 = vmax.f32 %v544, 0.0
    %v651 = vmax.f32 %v549, 0.0
    %v652 = vmax.f32 %v552, 0.0
    %v653 = vmax.f32 %v557, 0.0
    %v654 = vmax.f32 %v560, 0.0
    %v655 = vmax.f32 %v565, 0.0
    %v656 = vmax.f32 %v568, 0.0
    %v657 = vmax.f32 %v573, 0.0
    %v658 = vmax.f32 %v576, 0.0
    %v659 = vmax.f32 %v581, 0.0
    %v660 = vmax.f32 %v584, 0.0
    %v661 = vmax.f32 %v589, 0.0
    %v662 = vmax.f32 %v592, 0.0
    %v663 = vmax.f32 %v597, 0.0
    %v664 = vmax.f32 %v600, 0.0
    %v665 = vmax.f32 %v605, 0.0
    %v666 = vmax.f32 %v608, 0.0
    %v667 = vmax.f32 %v613, 0.0
    %v668 = vmax.f32 %v616, 0.0
    %v669 = vmax.f32 %v621, 0.0
    %v670 = vmax.f32 %v624, 0.0
    %v671 = vmax.f32 %v629, 0.0
    %v672 = vmax.f32 %v632, 0.0
    %v673 = vmax.f32 %v637, 0.0
    %v674 = vmax.f32 %v640, 0.0
    %v675 = vld [vmem:[#allocation8] sm:$0xff]
    %v676 = vld [vmem:[#allocation8 + $0x8] sm:$0xff]
    %v677 = vld [vmem:[#allocation8 + $0x10] sm:$0xff]
    %v678 = vld [vmem:[#allocation8 + $0x18] sm:$0xff]
    %v679 = vld [vmem:[#allocation8 + $0x20] sm:$0xff]
    %v680 = vld [vmem:[#allocation8 + $0x28] sm:$0xff]
    %v681 = vld [vmem:[#allocation8 + $0x30] sm:$0xff]
    %v682 = vld [vmem:[#allocation8 + $0x38] sm:$0xff]
    %v683 = vld [vmem:[#allocation8 + $0x40] sm:$0xff]
    %v684 = vld [vmem:[#allocation8 + $0x48] sm:$0xff]
    %v685 = vld [vmem:[#allocation8 + $0x50] sm:$0xff]
    %v686 = vld [vmem:[#allocation8 + $0x58] sm:$0xff]
    %v687 = vld [vmem:[#allocation8 + $0x60] sm:$0xff]
    %v688 = vld [vmem:[#allocation8 + $0x68] sm:$0xff]
    %v689 = vld [vmem:[#allocation8 + $0x70] sm:$0xff]
    %v690 = vld [vmem:[#allocation8 + $0x78] sm:$0xff]
    %v691 = vld [vmem:[%s6] sm:$0x1]
    %v693 = vlaneseq
    %v694 = vshrl.u32 %v693, 7
    %v695 = vsub.s32 0, %v694
    %v696 = vrot.slane %v691, %v695
    %698 = vmatprep.subr.mxu0 0.0
    %699 = vmatpush1.msra.mxu0 %v675
    %700 = vmatprep.subr.mxu0 0.0
    %701 = vmatpush1.msra.mxu0 %v676
    %702 = vmatprep.subr.mxu0 0.0
    %703 = vmatpush1.msra.mxu0 %v677
    %704 = vmatprep.subr.mxu0 0.0
    %705 = vmatpush1.msra.mxu0 %v678
    %706 = vmatprep.subr.mxu0 0.0
    %707 = vmatpush1.msra.mxu0 %v679
    %708 = vmatprep.subr.mxu0 0.0
    %709 = vmatpush1.msra.mxu0 %v680
    %710 = vmatprep.subr.mxu0 0.0
    %711 = vmatpush1.msra.mxu0 %v681
    %712 = vmatprep.subr.mxu0 0.0
    %713 = vmatpush1.msra.mxu0 %v682
    %714 = vmatprep.subr.mxu0 0.0
    %715 = vmatpush1.msra.mxu0 %v683
    %716 = vmatprep.subr.mxu0 0.0
    %717 = vmatpush1.msra.mxu0 %v684
    %718 = vmatprep.subr.mxu0 0.0
    %719 = vmatpush1.msra.mxu0 %v685
    %720 = vmatprep.subr.mxu0 0.0
    %721 = vmatpush1.msra.mxu0 %v686
    %722 = vmatprep.subr.mxu0 0.0
    %723 = vmatpush1.msra.mxu0 %v687
    %724 = vmatprep.subr.mxu0 0.0
    %725 = vmatpush1.msra.mxu0 %v688
    %726 = vmatprep.subr.mxu0 0.0
    %727 = vmatpush1.msra.mxu0 %v689
    %728 = vmatprep.subr.mxu0 0.0
    %729 = vmatpush1.msra.mxu0 %v690
    %730 = vmatprep.subr.mxu0 0.0
    %731 = vmatpush1.msra.mxu0 0.0
    %732 = vmatprep.subr.mxu0 0.0
    %733 = vmatpush1.msra.mxu0 0.0
    %734 = vmatprep.subr.mxu0 0.0
    %735 = vmatpush1.msra.mxu0 0.0
    %736 = vmatprep.subr.mxu0 0.0
    %737 = vmatpush1.msra.mxu0 0.0
    %738 = vmatprep.subr.mxu0 0.0
    %739 = vmatpush1.msra.mxu0 0.0
    %740 = vmatprep.subr.mxu0 0.0
    %741 = vmatpush1.msra.mxu0 0.0
    %742 = vmatprep.subr.mxu0 0.0
    %743 = vmatpush1.msra.mxu0 0.0
    %744 = vmatprep.subr.mxu0 0.0
    %745 = vmatpush1.msra.mxu0 0.0
    %746 = vmatprep.subr.mxu0 0.0
    %747 = vmatpush1.msra.mxu0 0.0
    %748 = vmatprep.subr.mxu0 0.0
    %749 = vmatpush1.msra.mxu0 0.0
    %750 = vmatprep.subr.mxu0 0.0
    %751 = vmatpush1.msra.mxu0 0.0
    %752 = vmatprep.subr.mxu0 0.0
    %753 = vmatpush1.msra.mxu0 0.0
    %754 = vmatprep.subr.mxu0 0.0
    %755 = vmatpush1.msra.mxu0 0.0
    %756 = vmatprep.subr.mxu0 0.0
    %757 = vmatpush1.msra.mxu0 0.0
    %758 = vmatprep.subr.mxu0 0.0
    %759 = vmatpush1.msra.mxu0 0.0
    %760 = vmatprep.subr.mxu0 0.0
    %761 = vmatpush1.msra.mxu0 0.0
    %762 = vmatprep.mubr.f32.mxu0 0.0
    %763 = vmatmul.mubr.f32.gmra.mrb[0].mxu0 %v643
    %v764 = vpop.f32.mrb[0].mxu0
    %v765 = vadd.f32 %v696, %v764
    %v766 = vpop.f32.mrb[0].mxu0
    %767 = vmatprep.mubr.f32.mxu0 0.0
    %768 = vmatmul.mubr.f32.gmra.mrb[0].mxu0 %v644
    %v769 = vpop.f32.mrb[0].mxu0
    %v770 = vadd.f32 %v696, %v769
    %v771 = vpop.f32.mrb[0].mxu0
    %772 = vmatprep.mubr.f32.mxu0 0.0
    %773 = vmatmul.mubr.f32.gmra.mrb[0].mxu0 %v645
    %v774 = vpop.f32.mrb[0].mxu0
    %v775 = vadd.f32 %v696, %v774
    %v776 = vpop.f32.mrb[0].mxu0
    %777 = vmatprep.mubr.f32.mxu0 0.0
    %778 = vmatmul.mubr.f32.gmra.mrb[0].mxu0 %v646
    %v779 = vpop.f32.mrb[0].mxu0
    %v780 = vadd.f32 %v696, %v779
    %v781 = vpop.f32.mrb[0].mxu0
    %782 = vmatprep.mubr.f32.mxu0 0.0
    %783 = vmatmul.mubr.f32.gmra.mrb[0].mxu0 %v647
    %v784 = vpop.f32.mrb[0].mxu0
    %v785 = vadd.f32 %v696, %v784
    %v786 = vpop.f32.mrb[0].mxu0
    %787 = vmatprep.mubr.f32.mxu0 0.0
    %788 = vmatmul.mubr.f32.gmra.mrb[0].mxu0 %v648
    %v789 = vpop.f32.mrb[0].mxu0
    %v790 = vadd.f32 %v696, %v789
    %v791 = vpop.f32.mrb[0].mxu0
    %792 = vmatprep.mubr.f32.mxu0 0.0
    %793 = vmatmul.mubr.f32.gmra.mrb[0].mxu0 %v649
    %v794 = vpop.f32.mrb[0].mxu0
    %v795 = vadd.f32 %v696, %v794
    %v796 = vpop.f32.mrb[0].mxu0
    %797 = vmatprep.mubr.f32.mxu0 0.0
    %798 = vmatmul.mubr.f32.gmra.mrb[0].mxu0 %v650
    %v799 = vpop.f32.mrb[0].mxu0
    %v800 = vadd.f32 %v696, %v799
    %v801 = vpop.f32.mrb[0].mxu0
    %802 = vmatprep.mubr.f32.mxu0 0.0
    %803 = vmatmul.mubr.f32.gmra.mrb[0].mxu0 %v651
    %v804 = vpop.f32.mrb[0].mxu0
    %v805 = vadd.f32 %v696, %v804
    %v806 = vpop.f32.mrb[0].mxu0
    %807 = vmatprep.mubr.f32.mxu0 0.0
    %808 = vmatmul.mubr.f32.gmra.mrb[0].mxu0 %v652
    %v809 = vpop.f32.mrb[0].mxu0
    %v810 = vadd.f32 %v696, %v809
    %v811 = vpop.f32.mrb[0].mxu0
    %812 = vmatprep.mubr.f32.mxu0 0.0
    %813 = vmatmul.mubr.f32.gmra.mrb[0].mxu0 %v653
    %v814 = vpop.f32.mrb[0].mxu0
    %v815 = vadd.f32 %v696, %v814
    %v816 = vpop.f32.mrb[0].mxu0
    %817 = vmatprep.mubr.f32.mxu0 0.0
    %818 = vmatmul.mubr.f32.gmra.mrb[0].mxu0 %v654
    %v819 = vpop.f32.mrb[0].mxu0
    %v820 = vadd.f32 %v696, %v819
    %v821 = vpop.f32.mrb[0].mxu0
    %822 = vmatprep.mubr.f32.mxu0 0.0
    %823 = vmatmul.mubr.f32.gmra.mrb[0].mxu0 %v655
    %v824 = vpop.f32.mrb[0].mxu0
    %v825 = vadd.f32 %v696, %v824
    %v826 = vpop.f32.mrb[0].mxu0
    %827 = vmatprep.mubr.f32.mxu0 0.0
    %828 = vmatmul.mubr.f32.gmra.mrb[0].mxu0 %v656
    %v829 = vpop.f32.mrb[0].mxu0
    %v830 = vadd.f32 %v696, %v829
    %v831 = vpop.f32.mrb[0].mxu0
    %832 = vmatprep.mubr.f32.mxu0 0.0
    %833 = vmatmul.mubr.f32.gmra.mrb[0].mxu0 %v657
    %v834 = vpop.f32.mrb[0].mxu0
    %v835 = vadd.f32 %v696, %v834
    %v836 = vpop.f32.mrb[0].mxu0
    %837 = vmatprep.mubr.f32.mxu0 0.0
    %838 = vmatmul.mubr.f32.gmra.mrb[0].mxu0 %v658
    %v839 = vpop.f32.mrb[0].mxu0
    %v840 = vadd.f32 %v696, %v839
    %v841 = vpop.f32.mrb[0].mxu0
    %842 = vmatprep.mubr.f32.mxu0 0.0
    %843 = vmatmul.mubr.f32.gmra.mrb[0].mxu0 %v659
    %v844 = vpop.f32.mrb[0].mxu0
    %v845 = vadd.f32 %v696, %v844
    %v846 = vpop.f32.mrb[0].mxu0
    %847 = vmatprep.mubr.f32.mxu0 0.0
    %848 = vmatmul.mubr.f32.gmra.mrb[0].mxu0 %v660
    %v849 = vpop.f32.mrb[0].mxu0
    %v850 = vadd.f32 %v696, %v849
    %v851 = vpop.f32.mrb[0].mxu0
    %852 = vmatprep.mubr.f32.mxu0 0.0
    %853 = vmatmul.mubr.f32.gmra.mrb[0].mxu0 %v661
    %v854 = vpop.f32.mrb[0].mxu0
    %v855 = vadd.f32 %v696, %v854
    %v856 = vpop.f32.mrb[0].mxu0
    %857 = vmatprep.mubr.f32.mxu0 0.0
    %858 = vmatmul.mubr.f32.gmra.mrb[0].mxu0 %v662
    %v859 = vpop.f32.mrb[0].mxu0
    %v860 = vadd.f32 %v696, %v859
    %v861 = vpop.f32.mrb[0].mxu0
    %862 = vmatprep.mubr.f32.mxu0 0.0
    %863 = vmatmul.mubr.f32.gmra.mrb[0].mxu0 %v663
    %v864 = vpop.f32.mrb[0].mxu0
    %v865 = vadd.f32 %v696, %v864
    %v866 = vpop.f32.mrb[0].mxu0
    %867 = vmatprep.mubr.f32.mxu0 0.0
    %868 = vmatmul.mubr.f32.gmra.mrb[0].mxu0 %v664
    %v869 = vpop.f32.mrb[0].mxu0
    %v870 = vadd.f32 %v696, %v869
    %v871 = vpop.f32.mrb[0].mxu0
    %872 = vmatprep.mubr.f32.mxu0 0.0
    %873 = vmatmul.mubr.f32.gmra.mrb[0].mxu0 %v665
    %v874 = vpop.f32.mrb[0].mxu0
    %v875 = vadd.f32 %v696, %v874
    %v876 = vpop.f32.mrb[0].mxu0
    %877 = vmatprep.mubr.f32.mxu0 0.0
    %878 = vmatmul.mubr.f32.gmra.mrb[0].mxu0 %v666
    %v879 = vpop.f32.mrb[0].mxu0
    %v880 = vadd.f32 %v696, %v879
    %v881 = vpop.f32.mrb[0].mxu0
    %882 = vmatprep.mubr.f32.mxu0 0.0
    %883 = vmatmul.mubr.f32.gmra.mrb[0].mxu0 %v667
    %v884 = vpop.f32.mrb[0].mxu0
    %v885 = vadd.f32 %v696, %v884
    %v886 = vpop.f32.mrb[0].mxu0
    %887 = vmatprep.mubr.f32.mxu0 0.0
    %888 = vmatmul.mubr.f32.gmra.mrb[0].mxu0 %v668
    %v889 = vpop.f32.mrb[0].mxu0
    %v890 = vadd.f32 %v696, %v889
    %v891 = vpop.f32.mrb[0].mxu0
    %892 = vmatprep.mubr.f32.mxu0 0.0
    %893 = vmatmul.mubr.f32.gmra.mrb[0].mxu0 %v669
    %v894 = vpop.f32.mrb[0].mxu0
    %v895 = vadd.f32 %v696, %v894
    %v896 = vpop.f32.mrb[0].mxu0
    %897 = vmatprep.mubr.f32.mxu0 0.0
    %898 = vmatmul.mubr.f32.gmra.mrb[0].mxu0 %v670
    %v899 = vpop.f32.mrb[0].mxu0
    %v900 = vadd.f32 %v696, %v899
    %v901 = vpop.f32.mrb[0].mxu0
    %902 = vmatprep.mubr.f32.mxu0 0.0
    %903 = vmatmul.mubr.f32.gmra.mrb[0].mxu0 %v671
    %v904 = vpop.f32.mrb[0].mxu0
    %v905 = vadd.f32 %v696, %v904
    %v906 = vpop.f32.mrb[0].mxu0
    %907 = vmatprep.mubr.f32.mxu0 0.0
    %908 = vmatmul.mubr.f32.gmra.mrb[0].mxu0 %v672
    %v909 = vpop.f32.mrb[0].mxu0
    %v910 = vadd.f32 %v696, %v909
    %v911 = vpop.f32.mrb[0].mxu0
    %912 = vmatprep.mubr.f32.mxu0 0.0
    %913 = vmatmul.mubr.f32.gmra.mrb[0].mxu0 %v673
    %v914 = vpop.f32.mrb[0].mxu0
    %v915 = vadd.f32 %v696, %v914
    %v916 = vpop.f32.mrb[0].mxu0
    %917 = vmatprep.mubr.f32.mxu0 0.0
    %918 = vmatmul.mubr.f32.gmra.mrb[0].mxu0 %v674
    %v919 = vpop.f32.mrb[0].mxu0
    %v920 = vadd.f32 %v696, %v919
    %v921 = vpop.f32.mrb[0].mxu0
    %922 = vdwg.mxu0
    %923 = vst [vmem:[#allocation10] sm:$0xff] %v765
    %924 = vst [vmem:[#allocation10 + $0x8] sm:$0xff] %v770
    %925 = vst [vmem:[#allocation10 + $0x10] sm:$0xff] %v775
    %926 = vst [vmem:[#allocation10 + $0x18] sm:$0xff] %v780
    %927 = vst [vmem:[#allocation10 + $0x20] sm:$0xff] %v785
    %928 = vst [vmem:[#allocation10 + $0x28] sm:$0xff] %v790
    %929 = vst [vmem:[#allocation10 + $0x30] sm:$0xff] %v795
    %930 = vst [vmem:[#allocation10 + $0x38] sm:$0xff] %v800
    %931 = vst [vmem:[#allocation10 + $0x40] sm:$0xff] %v805
    %932 = vst [vmem:[#allocation10 + $0x48] sm:$0xff] %v810
    %933 = vst [vmem:[#allocation10 + $0x50] sm:$0xff] %v815
    %934 = vst [vmem:[#allocation10 + $0x58] sm:$0xff] %v820
    %935 = vst [vmem:[#allocation10 + $0x60] sm:$0xff] %v825
    %936 = vst [vmem:[#allocation10 + $0x68] sm:$0xff] %v830
    %937 = vst [vmem:[#allocation10 + $0x70] sm:$0xff] %v835
    %938 = vst [vmem:[#allocation10 + $0x78] sm:$0xff] %v840
    %939 = vst [vmem:[#allocation10 + $0x80] sm:$0xff] %v845
    %940 = vst [vmem:[#allocation10 + $0x88] sm:$0xff] %v850
    %941 = vst [vmem:[#allocation10 + $0x90] sm:$0xff] %v855
    %942 = vst [vmem:[#allocation10 + $0x98] sm:$0xff] %v860
    %943 = vst [vmem:[#allocation10 + $0xa0] sm:$0xff] %v865
    %944 = vst [vmem:[#allocation10 + $0xa8] sm:$0xff] %v870
    %945 = vst [vmem:[#allocation10 + $0xb0] sm:$0xff] %v875
    %946 = vst [vmem:[#allocation10 + $0xb8] sm:$0xff] %v880
    %947 = vst [vmem:[#allocation10 + $0xc0] sm:$0xff] %v885
    %948 = vst [vmem:[#allocation10 + $0xc8] sm:$0xff] %v890
    %949 = vst [vmem:[#allocation10 + $0xd0] sm:$0xff] %v895
    %950 = vst [vmem:[#allocation10 + $0xd8] sm:$0xff] %v900
    %951 = vst [vmem:[#allocation10 + $0xe0] sm:$0xff] %v905
    %952 = vst [vmem:[#allocation10 + $0xe8] sm:$0xff] %v910
    %953 = vst [vmem:[#allocation10 + $0xf0] sm:$0xff] %v915
    %954 = vst [vmem:[#allocation10 + $0xf8] sm:$0xff] %v920
    // Predicated region
    $region46: #{tpu_custom_call.1} parent=1 // pred_check
      _
    $region47: #{tpu_custom_call.1} parent=1 // pred_check_branch
      %956 = sbr.rel (0) target = $region49
    $region48: #{tpu_custom_call.1} parent=1 // pred_region
      %s958 = ssub.s32 4096, 4096
      %959 = vsyncadd [#allocation4], %s958
      %s960 = sshll.u32 [#allocation10], 4
      %s961 = int_to_ptr.vmem [resolvable:$true] %s960
      %966 = dma.vmem_to_hbm [thread:$0]  %s961, 4096, %s7, [#allocation4], 128, 128, 8
    $region49: #{tpu_custom_call.1} parent=1 // pred_fallthru
      _
    // Predicated region
    $region50: #{tpu_custom_call.1} parent=1 // pred_check
      _
    $region51: #{tpu_custom_call.1} parent=1 // pred_check_branch
      %968 = sbr.rel (0) target = $region53
    $region52: #{tpu_custom_call.1} parent=1 // pred_region
      %969 = dma.done [#allocation4], 4096
    $region53: #{tpu_custom_call.1} parent=1 // pred_fallthru
      _
    %970 = vsyncpa [#allocation3], 1
    %971 = vsyncpa [#allocation6], 1
    %972 = vsyncpa [#allocation9], 1
    %973 = vsyncpa [#allocation4], 1

</llo_original>
